<compile_context>
chip_gen: v5e
topology: v5e:2x2
jax: 0.10.0
libtpu: 0.0.40
codegen_flags: <defaults>
</compile_context>

<pallas_src>
import functools

import jax
import jax.numpy as jnp
from jax import lax
from jax.experimental import pallas as pl
from jax.experimental.pallas import tpu as pltpu


def _vfl_kernel(pred_ref, gt_ref, label_ref, acc_ref, *, alpha, gamma, m, tm, steps):
    part = pl.program_id(0)
    k = pl.program_id(1)

    @pl.when(k == 0)
    def _():
        acc_ref[...] = jnp.zeros_like(acc_ref)

    # All math in float32 (matches torch.amp.autocast(enabled=False) + .float()).
    p = pred_ref[...].astype(jnp.float32)
    g = gt_ref[...].astype(jnp.float32)
    lbl = label_ref[...].astype(jnp.float32)

    # weight = alpha * pred**gamma * (1 - label) + gt * label
    if float(gamma).is_integer() and 0.0 <= float(gamma) <= 16.0:
        # Integer gamma (default 2.0): pure VPU multiplies, no EUP pow.
        p_gamma = lax.integer_pow(p, int(gamma))
        log_p = jnp.maximum(jnp.log(p), -100.0)
    else:
        # Share one log(p) between BCE and the pow: p**gamma = exp(gamma*log(p)).
        lp = jnp.log(p)
        log_p = jnp.maximum(lp, -100.0)
        p_gamma = jnp.exp(jnp.float32(gamma) * lp)
    weight = alpha * p_gamma * (1.0 - lbl) + g * lbl

    # F.binary_cross_entropy(pred, gt, reduction='none'), logs clamped at -100.
    log_1mp = jnp.maximum(jnp.log(1.0 - p), -100.0)
    bce = -(g * log_p + (1.0 - g) * log_1mp)

    n = p.shape[-1]
    # Ragged-tile row mask: global row id < m.  Overflow blocks (tile index
    # beyond the last real tile, possible when an odd tile count is split over
    # two partitions) get an all-False mask and contribute nothing.  The mask
    # is a select, so garbage (NaN/Inf) in out-of-bounds rows cannot leak in.
    tile_idx = part * steps + k
    row_ids = tile_idx * tm + lax.broadcasted_iota(jnp.int32, (tm, n), 0)
    contrib = jnp.where(row_ids < m, bce * weight, 0.0)

    # Cross-vreg partial reduction (VPU adds only); final reduce in wrapper.
    acc_ref[...] += contrib.reshape(tm // 8, 8, n).sum(axis=0)


def varifocal_loss(pred_score, gt_score, label, alpha=0.75, gamma=2.0, tile_rows=None):
    assert pred_score.shape == gt_score.shape == label.shape
    n = pred_score.shape[-1]
    pred2d = pred_score.reshape(-1, n)
    gt2d = gt_score.reshape(-1, n)
    lbl2d = label.reshape(-1, n)
    m = pred2d.shape[0]

    # ---- tile size --------------------------------------------------------
    # Block last dim == full class axis (no lane padding); rows tiled with an
    # in-kernel mask for the ragged tail (no row padding, no jnp.pad copies).
    if tile_rows is None:
        n_vmem = ((n + 127) // 128) * 128  # lane-padded VMEM row width
        itemsizes = (jnp.dtype(pred2d.dtype).itemsize
                     + jnp.dtype(gt2d.dtype).itemsize
                     + jnp.dtype(lbl2d.dtype).itemsize)
        # 2 pipeline buffers per input, ~12 MiB budget; leaves room for the
        # kernel's elementwise temporaries under the 32 MiB scoped-VMEM limit
        # (safe on v7x's 64 MiB physical VMEM as well as v5e/v6e).
        tm = max(8, ((12 * 1024 * 1024) // (2 * n_vmem * itemsizes)) // 8 * 8)
        tm = int(min(2048, tm))
    else:
        assert tile_rows % 8 == 0
        tm = int(tile_rows)
    tm = min(tm, ((m + 7) // 8) * 8)

    total_tiles = -(-m // tm)
    # Two "parallel" partitions whenever there are >= 2 tiles so both v7x
    # TensorCores share the stream; on single-core v5e/v6e this only costs one
    # extra tiny (8, n) accumulator block.
    num_parts = 2 if total_tiles >= 2 else 1
    steps = -(-total_tiles // num_parts)

    if num_parts * steps == total_tiles:
        in_map = lambda p_, k_: (p_ * steps + k_, 0)
    else:
        # Odd tile count: clamp the overflow block onto the last real tile
        # (its rows are fully masked in-kernel, so it adds exactly zero).
        last = total_tiles - 1
        in_map = lambda p_, k_: (jnp.minimum(p_ * steps + k_, last), 0)

    kernel = functools.partial(_vfl_kernel, alpha=float(alpha), gamma=float(gamma),
                               m=m, tm=tm, steps=steps)

    partials = pl.pallas_call(
        kernel,
        out_shape=jax.ShapeDtypeStruct((num_parts * 8, n), jnp.float32),
        grid_spec=pltpu.PrefetchScalarGridSpec(
            num_scalar_prefetch=0,
            grid=(num_parts, steps),
            in_specs=[
                pl.BlockSpec((tm, n), in_map),
                pl.BlockSpec((tm, n), in_map),
                pl.BlockSpec((tm, n), in_map),
            ],
            # Output block = per-partition accumulator, resident across the
            # "arbitrary" reduction axis.
            out_specs=pl.BlockSpec((8, n), lambda p_, k_: (p_, 0)),
        ),
        compiler_params=pltpu.CompilerParams(
            dimension_semantics=("parallel", "arbitrary"),
            vmem_limit_bytes=32 * 1024 * 1024,
        ),
    )(pred2d, gt2d, lbl2d)

    # Tiny epilogue reduce of (num_parts*8, n) partials to the scalar loss.
    return jnp.sum(partials)


def varifocal_loss_ref(pred_score, gt_score, label, alpha=0.75, gamma=2.0):
    p = pred_score.astype(jnp.float32)
    g = gt_score.astype(jnp.float32)
    lbl = label.astype(jnp.float32)
    weight = alpha * (p ** gamma) * (1.0 - lbl) + g * lbl
    log_p = jnp.maximum(jnp.log(p), -100.0)
    log_1mp = jnp.maximum(jnp.log(1.0 - p), -100.0)
    bce = -(g * log_p + (1.0 - g) * log_1mp)
    return jnp.sum(bce * weight)


if __name__ == "__main__":
    def make_inputs(key, shape, dtype=jnp.float32):
        k1, k2, k3 = jax.random.split(key, 3)
        pred = jax.nn.sigmoid(jax.random.normal(k1, shape, jnp.float32)).astype(dtype)
        gt = jax.random.uniform(k2, shape, jnp.float32).astype(dtype)
        lbl = (jax.random.uniform(k3, shape) > 0.9).astype(jnp.float32)
        return pred, gt, lbl

    checks = []

    # 1) Baseline (batch, anchors, classes) = (2, 100, 80): single tile,
    #    non-multiple-of-128 class axis (no lane padding).
    p1, g1, l1 = make_inputs(jax.random.PRNGKey(0), (2, 100, 80))
    checks.append((varifocal_loss(p1, g1, l1), varifocal_loss_ref(p1, g1, l1)))

    # 2) Flattened rows not a multiple of 8 (ragged tile + in-kernel mask).
    p2, g2, l2 = make_inputs(jax.random.PRNGKey(1), (1, 13, 80))
    checks.append((varifocal_loss(p2, g2, l2), varifocal_loss_ref(p2, g2, l2)))

    # 3) Multi-tile, 2 partitions, odd tile count (exercises the clamped
    #    overflow block and the ragged last tile) via a small explicit tile.
    checks.append((varifocal_loss(p1, g1, l1, tile_rows=72),
                   varifocal_loss_ref(p1, g1, l1)))

    # 4) bf16 pred/gt (half the HBM traffic); upcast to f32 happens in-kernel.
    p4, g4, l4 = make_inputs(jax.random.PRNGKey(2), (2, 100, 80), dtype=jnp.bfloat16)
    checks.append((varifocal_loss(p4, g4, l4), varifocal_loss_ref(p4, g4, l4)))

    for got, want in checks:
        jax.block_until_ready(got)
        assert jnp.allclose(got, want, rtol=1e-5, atol=1e-3), (got, want)

    print("KERNEL_OK")
</pallas_src>

<mosaic_0001>
module attributes {stable_mosaic.version = 11 : i64} {
  func.func @_vfl_kernel(%arg0: i32, %arg1: i32, %arg2: memref<200x80xf32, #tpu.memory_space<vmem>>, %arg3: memref<200x80xf32, #tpu.memory_space<vmem>>, %arg4: memref<200x80xf32, #tpu.memory_space<vmem>>, %arg5: memref<8x80xf32, #tpu.memory_space<vmem>>) attributes {dimension_semantics = [#tpu.dimension_semantics<parallel>, #tpu.dimension_semantics<arbitrary>], iteration_bounds = array<i64: 1, 1>, scalar_prefetch = 0 : i64, scratch_operands = 0 : i64, tpu.core_type = #tpu.core_type<tc>, window_params = [{transform_indices = @transform_0, window_bounds = array<i64: 200, 80>}, {transform_indices = @transform_1, window_bounds = array<i64: 200, 80>}, {transform_indices = @transform_2, window_bounds = array<i64: 200, 80>}, {transform_indices = @transform_3, window_bounds = array<i64: 8, 80>}]} {
    %c0_i32 = arith.constant 0 : i32
    %0 = arith.cmpi eq, %arg1, %c0_i32 : i32
    %1 = arith.extui %0 : i1 to i32
    %c0_i32_0 = arith.constant 0 : i32
    %2 = arith.cmpi ne, %1, %c0_i32_0 : i32
    scf.if %2 {
      %cst_19 = arith.constant 0.000000e+00 : f32
      %45 = vector.broadcast %cst_19 : f32 to vector<8x80xf32>
      %c0_20 = arith.constant 0 : index
      %c0_21 = arith.constant 0 : index
      %46 = vector.load %arg5[%c0_20, %c0_21] : memref<8x80xf32, #tpu.memory_space<vmem>>, vector<8x80xf32>
      tpu.vector_store %arg5[%c0_20, %c0_21], %45 {strides = array<i32>} : memref<8x80xf32, #tpu.memory_space<vmem>>, vector<8x80xf32>,
    } else {
    }
    %c0 = arith.constant 0 : index
    %c0_1 = arith.constant 0 : index
    %3 = vector.load %arg2[%c0, %c0_1] : memref<200x80xf32, #tpu.memory_space<vmem>>, vector<200x80xf32>
    %c0_2 = arith.constant 0 : index
    %c0_3 = arith.constant 0 : index
    %4 = vector.load %arg3[%c0_2, %c0_3] : memref<200x80xf32, #tpu.memory_space<vmem>>, vector<200x80xf32>
    %c0_4 = arith.constant 0 : index
    %c0_5 = arith.constant 0 : index
    %5 = vector.load %arg4[%c0_4, %c0_5] : memref<200x80xf32, #tpu.memory_space<vmem>>, vector<200x80xf32>
    %6 = arith.mulf %3, %3 : vector<200x80xf32>
    %7 = math.log %3 : vector<200x80xf32>
    %cst = arith.constant -1.000000e+02 : f32
    %8 = vector.broadcast %cst : f32 to vector<200x80xf32>
    %9 = arith.maximumf %7, %8 : vector<200x80xf32>
    %cst_6 = arith.constant 7.500000e-01 : f32
    %10 = vector.broadcast %cst_6 : f32 to vector<200x80xf32>
    %11 = arith.mulf %10, %6 : vector<200x80xf32>
    %cst_7 = arith.constant 1.000000e+00 : f32
    %12 = vector.broadcast %cst_7 : f32 to vector<200x80xf32>
    %13 = arith.subf %12, %5 : vector<200x80xf32>
    %14 = arith.mulf %11, %13 : vector<200x80xf32>
    %15 = arith.mulf %4, %5 : vector<200x80xf32>
    %16 = arith.addf %14, %15 : vector<200x80xf32>
    %cst_8 = arith.constant 1.000000e+00 : f32
    %17 = vector.broadcast %cst_8 : f32 to vector<200x80xf32>
    %18 = arith.subf %17, %3 : vector<200x80xf32>
    %19 = math.log %18 : vector<200x80xf32>
    %cst_9 = arith.constant -1.000000e+02 : f32
    %20 = vector.broadcast %cst_9 : f32 to vector<200x80xf32>
    %21 = arith.maximumf %19, %20 : vector<200x80xf32>
    %22 = arith.mulf %4, %9 : vector<200x80xf32>
    %cst_10 = arith.constant 1.000000e+00 : f32
    %23 = vector.broadcast %cst_10 : f32 to vector<200x80xf32>
    %24 = arith.subf %23, %4 : vector<200x80xf32>
    %25 = arith.mulf %24, %21 : vector<200x80xf32>
    %26 = arith.addf %22, %25 : vector<200x80xf32>
    %cst_11 = arith.constant 0.000000e+00 : f32
    %27 = vector.broadcast %cst_11 : f32 to vector<200x80xf32>
    %28 = arith.subf %27, %26 : vector<200x80xf32>
    %c1_i32 = arith.constant 1 : i32
    %29 = arith.muli %arg0, %c1_i32 : i32
    %30 = arith.addi %29, %arg1 : i32
    %c200_i32 = arith.constant 200 : i32
    %31 = arith.muli %30, %c200_i32 : i32
    %32 = tpu.iota {dimensions = array<i32: 0>} : vector<200x80xi32>
    %33 = vector.broadcast %31 : i32 to vector<200x80xi32>
    %34 = arith.addi %33, %32 : vector<200x80xi32>
    %c200_i32_12 = arith.constant 200 : i32
    %35 = vector.broadcast %c200_i32_12 : i32 to vector<200x80xi32>
    %36 = arith.cmpi slt, %34, %35 : vector<200x80xi32>
    %37 = arith.mulf %28, %16 : vector<200x80xf32>
    %cst_13 = arith.constant 0.000000e+00 : f32
    %38 = vector.broadcast %cst_13 : f32 to vector<200x80xf32>
    %39 = arith.select %36, %37, %38 : vector<200x80xi1>, vector<200x80xf32>
    %c0_14 = arith.constant 0 : index
    %c0_15 = arith.constant 0 : index
    %40 = vector.load %arg5[%c0_14, %c0_15] : memref<8x80xf32, #tpu.memory_space<vmem>>, vector<8x80xf32>
    %41 = vector.shape_cast %39 : vector<200x80xf32> to vector<25x8x80xf32>
    %cst_16 = arith.constant dense<0.000000e+00> : vector<8x80xf32>
    %42 = vector.multi_reduction <add>, %41, %cst_16 [0] : vector<25x8x80xf32> to vector<8x80xf32>
    %43 = arith.addf %40, %42 : vector<8x80xf32>
    %c0_17 = arith.constant 0 : index
    %c0_18 = arith.constant 0 : index
    %44 = vector.load %arg5[%c0_17, %c0_18] : memref<8x80xf32, #tpu.memory_space<vmem>>, vector<8x80xf32>
    tpu.vector_store %arg5[%c0_17, %c0_18], %43 {strides = array<i32>} : memref<8x80xf32, #tpu.memory_space<vmem>>, vector<8x80xf32>,
    return
  }
  func.func @transform_0(%arg0: i32, %arg1: i32) -> (i32, i32) {
    %c1_i32 = arith.constant 1 : i32
    %0 = arith.muli %arg0, %c1_i32 : i32
    %1 = arith.addi %0, %arg1 : i32
    %c0_i32 = arith.constant 0 : i32
    %c0_i32_0 = arith.constant 0 : i32
    return %1, %c0_i32 : i32, i32
  }
  func.func @transform_1(%arg0: i32, %arg1: i32) -> (i32, i32) {
    %c1_i32 = arith.constant 1 : i32
    %0 = arith.muli %arg0, %c1_i32 : i32
    %1 = arith.addi %0, %arg1 : i32
    %c0_i32 = arith.constant 0 : i32
    %c0_i32_0 = arith.constant 0 : i32
    return %1, %c0_i32 : i32, i32
  }
  func.func @transform_2(%arg0: i32, %arg1: i32) -> (i32, i32) {
    %c1_i32 = arith.constant 1 : i32
    %0 = arith.muli %arg0, %c1_i32 : i32
    %1 = arith.addi %0, %arg1 : i32
    %c0_i32 = arith.constant 0 : i32
    %c0_i32_0 = arith.constant 0 : i32
    return %1, %c0_i32 : i32, i32
  }
  func.func @transform_3(%arg0: i32, %arg1: i32) -> (i32, i32) {
    %c0_i32 = arith.constant 0 : i32
    %c0_i32_0 = arith.constant 0 : i32
    return %arg0, %c0_i32 : i32, i32
  }
}

</mosaic_0001>

<llo_original>
// kernel: tpu_custom_call.1
$region0: #{tpu_custom_call.1}
  #allocation0 [shape = 'u32[]', space=smem, size = 0x4, offset = 0x4, fixed_abs, tag = 'smem constant byte address 0x4 - core index']
  #allocation1 [shape = 'u32[72,128]{1,0:T(1,128)}', space=vmem, size = 0x9000, scoped, tag = 'internal scratch']
  %s0 = inlined_call_operand.vmem [shape: f32[200,80], index: 0, kind: input, shape index: {}]
  %s1 = inlined_call_operand.vmem [shape: f32[200,80], index: 1, kind: input, shape index: {}]
  %s2 = inlined_call_operand.vmem [shape: f32[200,80], index: 2, kind: input, shape index: {}]
  %s3 = inlined_call_operand.hbm [shape: f32[8,80], index: 3, kind: output, shape index: {}]
  %s4 = sld [smem:[#allocation0]]
  $region26: #{tpu_custom_call.1} parent=0
    _
  %s6 = ssub.s32 1, %s4
  %s7 = scalar_select 0, %s6, %s4
  $region1: #{tpu_custom_call.1} parent=0
    #allocation2 [shape = 'u8[4096]{0}', space=vmem, size = 0x1000, scoped, tag = 'output window, operand 0, single buffered']
    #allocation3 [shape = 's32[1]{0}', space=sflag, size = 0x4, scoped, tag = 'scoped memory for tpu_custom_call.1']
    %8 = vsyncpa [#allocation3], 0
    // Predicated region
    $region2: #{tpu_custom_call.1} parent=1 // pred_check
      _
    $region3: #{tpu_custom_call.1} parent=1 // pred_check_branch
      %10 = sbr.rel (0) target = $region5
    $region4: #{tpu_custom_call.1} parent=1 // pred_region
      %s11 = sadd.s32 0, 0
      %s12 = smul.u32 25, %s11
      %p13 = scmp.lt.s32.totalorder %s12, 24
      %s14 = scalar_select %p13, %s12, 24
      %s15 = smul.addr %s14, 8
      %s16 = scalar_lea.vmem %s0, %s15
      %s17 = sadd.s32 0, 0
      %s18 = smul.u32 25, %s17
    $region5: #{tpu_custom_call.1} parent=1 // pred_fallthru
      _
    // Predicated region
    $region6: #{tpu_custom_call.1} parent=1 // pred_check
      _
    $region7: #{tpu_custom_call.1} parent=1 // pred_check_branch
      %20 = sbr.rel (0) target = $region9
    $region8: #{tpu_custom_call.1} parent=1 // pred_region
      %s21 = sadd.s32 0, 0
      %s22 = smul.u32 25, %s21
      %p23 = scmp.lt.s32.totalorder %s22, 24
      %s24 = scalar_select %p23, %s22, 24
      %s25 = smul.addr %s24, 8
      %s26 = scalar_lea.vmem %s1, %s25
      %s27 = sadd.s32 0, 0
      %s28 = smul.u32 25, %s27
    $region9: #{tpu_custom_call.1} parent=1 // pred_fallthru
      _
    // Predicated region
    $region10: #{tpu_custom_call.1} parent=1 // pred_check
      _
    $region11: #{tpu_custom_call.1} parent=1 // pred_check_branch
      %30 = sbr.rel (0) target = $region13
    $region12: #{tpu_custom_call.1} parent=1 // pred_region
      %s31 = sadd.s32 0, 0
      %s32 = smul.u32 25, %s31
      %p33 = scmp.lt.s32.totalorder %s32, 24
      %s34 = scalar_select %p33, %s32, 24
      %s35 = smul.addr %s34, 8
      %s36 = scalar_lea.vmem %s2, %s35
      %s37 = sadd.s32 0, 0
      %s38 = smul.u32 25, %s37
    $region13: #{tpu_custom_call.1} parent=1 // pred_fallthru
      _
    %s39 = sadd.s32 0, 0
    %s40 = smul.u32 25, %s39
    %p41 = scmp.lt.s32.totalorder %s40, 24
    %s42 = scalar_select %p41, %s40, 24
    %s43 = smul.addr %s42, 8
    %s44 = scalar_lea.vmem %s0, %s43
    %s45 = sadd.s32 0, 0
    %s46 = smul.u32 25, %s45
    %p47 = scmp.lt.s32.totalorder %s46, 24
    %s48 = scalar_select %p47, %s46, 24
    %s49 = smul.addr %s48, 8
    %s50 = scalar_lea.vmem %s1, %s49
    %s51 = sadd.s32 0, 0
    %s52 = smul.u32 25, %s51
    %p53 = scmp.lt.s32.totalorder %s52, 24
    %s54 = scalar_select %p53, %s52, 24
    %s55 = smul.addr %s54, 8
    %s56 = scalar_lea.vmem %s2, %s55
    %s57 = sadd.s32 0, 0
    %s58 = smul.u32 25, %s57
    %p59 = scmp.lt.s32.totalorder %s58, 24
    %s60 = scalar_select %p59, %s58, 24
    %s61 = smul.addr %s60, 8
    %s62 = scalar_lea.vmem %s0, %s61
    %s63 = sadd.s32 0, 0
    %s64 = smul.u32 25, %s63
    %s65 = sadd.s32 0, 0
    %s66 = smul.u32 25, %s65
    %p67 = scmp.lt.s32.totalorder %s66, 24
    %s68 = scalar_select %p67, %s66, 24
    %s69 = smul.addr %s68, 8
    %s70 = scalar_lea.vmem %s1, %s69
    %s71 = sadd.s32 0, 0
    %s72 = smul.u32 25, %s71
    %s73 = sadd.s32 0, 0
    %s74 = smul.u32 25, %s73
    %p75 = scmp.lt.s32.totalorder %s74, 24
    %s76 = scalar_select %p75, %s74, 24
    %s77 = smul.addr %s76, 8
    %s78 = scalar_lea.vmem %s2, %s77
    %s79 = sadd.s32 0, 0
    %s80 = smul.u32 25, %s79
    %p81 = scmp.eq.s32.totalorder 0, 0
    // Predicated region
    $region14: #{tpu_custom_call.1} parent=1 // pred_check
      %p82 = pneg %p81
    $region15: #{tpu_custom_call.1} parent=1 // pred_check_branch
      %84 = sbr.rel (%p82) target = $region17
    $region16: #{tpu_custom_call.1} parent=1 // pred_region
      %vm85 = vcmask 654336
      %86 = vst.msk [vmem:[#allocation2] sm:$0xff] %vm85, 0.0
    $region17: #{tpu_custom_call.1} parent=1 // pred_fallthru
      _
    %v87 = vld [vmem:[%s62] sm:$0xff]
    %v88 = vld [vmem:[%s62 + $0x8] sm:$0xff]
    %v89 = vld [vmem:[%s62 + $0x10] sm:$0xff]
    %v90 = vld [vmem:[%s62 + $0x18] sm:$0xff]
    %v91 = vld [vmem:[%s62 + $0x20] sm:$0xff]
    %v92 = vld [vmem:[%s62 + $0x28] sm:$0xff]
    %v93 = vld [vmem:[%s62 + $0x30] sm:$0xff]
    %v94 = vld [vmem:[%s62 + $0x38] sm:$0xff]
    %v95 = vld [vmem:[%s62 + $0x40] sm:$0xff]
    %v96 = vld [vmem:[%s62 + $0x48] sm:$0xff]
    %v97 = vld [vmem:[%s62 + $0x50] sm:$0xff]
    %v98 = vld [vmem:[%s62 + $0x58] sm:$0xff]
    %v99 = vld [vmem:[%s62 + $0x60] sm:$0xff]
    %v100 = vld [vmem:[%s62 + $0x68] sm:$0xff]
    %v101 = vld [vmem:[%s62 + $0x70] sm:$0xff]
    %v102 = vld [vmem:[%s62 + $0x78] sm:$0xff]
    %v103 = vld [vmem:[%s62 + $0x80] sm:$0xff]
    %v104 = vld [vmem:[%s62 + $0x88] sm:$0xff]
    %v105 = vld [vmem:[%s62 + $0x90] sm:$0xff]
    %v106 = vld [vmem:[%s62 + $0x98] sm:$0xff]
    %v107 = vld [vmem:[%s62 + $0xa0] sm:$0xff]
    %v108 = vld [vmem:[%s62 + $0xa8] sm:$0xff]
    %v109 = vld [vmem:[%s62 + $0xb0] sm:$0xff]
    %v110 = vld [vmem:[%s62 + $0xb8] sm:$0xff]
    %v111 = vld [vmem:[%s62 + $0xc0] sm:$0xff]
    %v112 = vld [vmem:[%s70] sm:$0xff]
    %v113 = vld [vmem:[%s70 + $0x8] sm:$0xff]
    %v114 = vld [vmem:[%s70 + $0x10] sm:$0xff]
    %v115 = vld [vmem:[%s70 + $0x18] sm:$0xff]
    %v116 = vld [vmem:[%s70 + $0x20] sm:$0xff]
    %v117 = vld [vmem:[%s70 + $0x28] sm:$0xff]
    %v118 = vld [vmem:[%s70 + $0x30] sm:$0xff]
    %v119 = vld [vmem:[%s70 + $0x38] sm:$0xff]
    %v120 = vld [vmem:[%s70 + $0x40] sm:$0xff]
    %v121 = vld [vmem:[%s70 + $0x48] sm:$0xff]
    %v122 = vld [vmem:[%s70 + $0x50] sm:$0xff]
    %v123 = vld [vmem:[%s70 + $0x58] sm:$0xff]
    %v124 = vld [vmem:[%s70 + $0x60] sm:$0xff]
    %v125 = vld [vmem:[%s70 + $0x68] sm:$0xff]
    %v126 = vld [vmem:[%s70 + $0x70] sm:$0xff]
    %v127 = vld [vmem:[%s70 + $0x78] sm:$0xff]
    %v128 = vld [vmem:[%s70 + $0x80] sm:$0xff]
    %v129 = vld [vmem:[%s70 + $0x88] sm:$0xff]
    %v130 = vld [vmem:[%s70 + $0x90] sm:$0xff]
    %v131 = vld [vmem:[%s70 + $0x98] sm:$0xff]
    %v132 = vld [vmem:[%s70 + $0xa0] sm:$0xff]
    %v133 = vld [vmem:[%s70 + $0xa8] sm:$0xff]
    %v134 = vld [vmem:[%s70 + $0xb0] sm:$0xff]
    %v135 = vld [vmem:[%s70 + $0xb8] sm:$0xff]
    %v136 = vld [vmem:[%s70 + $0xc0] sm:$0xff]
    %v137 = vld [vmem:[%s78] sm:$0xff]
    %v138 = vld [vmem:[%s78 + $0x8] sm:$0xff]
    %v139 = vld [vmem:[%s78 + $0x10] sm:$0xff]
    %v140 = vld [vmem:[%s78 + $0x18] sm:$0xff]
    %v141 = vld [vmem:[%s78 + $0x20] sm:$0xff]
    %v142 = vld [vmem:[%s78 + $0x28] sm:$0xff]
    %v143 = vld [vmem:[%s78 + $0x30] sm:$0xff]
    %v144 = vld [vmem:[%s78 + $0x38] sm:$0xff]
    %v145 = vld [vmem:[%s78 + $0x40] sm:$0xff]
    %v146 = vld [vmem:[%s78 + $0x48] sm:$0xff]
    %v147 = vld [vmem:[%s78 + $0x50] sm:$0xff]
    %v148 = vld [vmem:[%s78 + $0x58] sm:$0xff]
    %v149 = vld [vmem:[%s78 + $0x60] sm:$0xff]
    %v150 = vld [vmem:[%s78 + $0x68] sm:$0xff]
    %v151 = vld [vmem:[%s78 + $0x70] sm:$0xff]
    %v152 = vld [vmem:[%s78 + $0x78] sm:$0xff]
    %v153 = vld [vmem:[%s78 + $0x80] sm:$0xff]
    %v154 = vld [vmem:[%s78 + $0x88] sm:$0xff]
    %v155 = vld [vmem:[%s78 + $0x90] sm:$0xff]
    %v156 = vld [vmem:[%s78 + $0x98] sm:$0xff]
    %v157 = vld [vmem:[%s78 + $0xa0] sm:$0xff]
    %v158 = vld [vmem:[%s78 + $0xa8] sm:$0xff]
    %v159 = vld [vmem:[%s78 + $0xb0] sm:$0xff]
    %v160 = vld [vmem:[%s78 + $0xb8] sm:$0xff]
    %v161 = vld [vmem:[%s78 + $0xc0] sm:$0xff]
    %v162 = vmul.f32 %v87, %v87
    %v163 = vmul.f32 %v88, %v88
    %v164 = vmul.f32 %v89, %v89
    %v165 = vmul.f32 %v90, %v90
    %v166 = vmul.f32 %v91, %v91
    %v167 = vmul.f32 %v92, %v92
    %v168 = vmul.f32 %v93, %v93
    %v169 = vmul.f32 %v94, %v94
    %v170 = vmul.f32 %v95, %v95
    %v171 = vmul.f32 %v96, %v96
    %v172 = vmul.f32 %v97, %v97
    %v173 = vmul.f32 %v98, %v98
    %v174 = vmul.f32 %v99, %v99
    %v175 = vmul.f32 %v100, %v100
    %v176 = vmul.f32 %v101, %v101
    %v177 = vmul.f32 %v102, %v102
    %v178 = vmul.f32 %v103, %v103
    %v179 = vmul.f32 %v104, %v104
    %v180 = vmul.f32 %v105, %v105
    %v181 = vmul.f32 %v106, %v106
    %v182 = vmul.f32 %v107, %v107
    %v183 = vmul.f32 %v108, %v108
    %v184 = vmul.f32 %v109, %v109
    %v185 = vmul.f32 %v110, %v110
    %v186 = vmul.f32 %v111, %v111
    %v187 = vlog2.pop %v87
    %v188 = vmul.f32 %v187, 0.6931472
    %v189 = vlog2.pop %v88
    %v190 = vmul.f32 %v189, 0.6931472
    %v191 = vlog2.pop %v89
    %v192 = vmul.f32 %v191, 0.6931472
    %v193 = vlog2.pop %v90
    %v194 = vmul.f32 %v193, 0.6931472
    %v195 = vlog2.pop %v91
    %v196 = vmul.f32 %v195, 0.6931472
    %v197 = vlog2.pop %v92
    %v198 = vmul.f32 %v197, 0.6931472
    %v199 = vlog2.pop %v93
    %v200 = vmul.f32 %v199, 0.6931472
    %v201 = vlog2.pop %v94
    %v202 = vmul.f32 %v201, 0.6931472
    %v203 = vlog2.pop %v95
    %v204 = vmul.f32 %v203, 0.6931472
    %v205 = vlog2.pop %v96
    %v206 = vmul.f32 %v205, 0.6931472
    %v207 = vlog2.pop %v97
    %v208 = vmul.f32 %v207, 0.6931472
    %v209 = vlog2.pop %v98
    %v210 = vmul.f32 %v209, 0.6931472
    %v211 = vlog2.pop %v99
    %v212 = vmul.f32 %v211, 0.6931472
    %v213 = vlog2.pop %v100
    %v214 = vmul.f32 %v213, 0.6931472
    %v215 = vlog2.pop %v101
    %v216 = vmul.f32 %v215, 0.6931472
    %v217 = vlog2.pop %v102
    %v218 = vmul.f32 %v217, 0.6931472
    %v219 = vlog2.pop %v103
    %v220 = vmul.f32 %v219, 0.6931472
    %v221 = vlog2.pop %v104
    %v222 = vmul.f32 %v221, 0.6931472
    %v223 = vlog2.pop %v105
    %v224 = vmul.f32 %v223, 0.6931472
    %v225 = vlog2.pop %v106
    %v226 = vmul.f32 %v225, 0.6931472
    %v227 = vlog2.pop %v107
    %v228 = vmul.f32 %v227, 0.6931472
    %v229 = vlog2.pop %v108
    %v230 = vmul.f32 %v229, 0.6931472
    %v231 = vlog2.pop %v109
    %v232 = vmul.f32 %v231, 0.6931472
    %v233 = vlog2.pop %v110
    %v234 = vmul.f32 %v233, 0.6931472
    %v235 = vlog2.pop %v111
    %v236 = vmul.f32 %v235, 0.6931472
    %v237 = vmax.f32 %v188, -100.0
    %v238 = vmax.f32 %v190, -100.0
    %v239 = vmax.f32 %v192, -100.0
    %v240 = vmax.f32 %v194, -100.0
    %v241 = vmax.f32 %v196, -100.0
    %v242 = vmax.f32 %v198, -100.0
    %v243 = vmax.f32 %v200, -100.0
    %v244 = vmax.f32 %v202, -100.0
    %v245 = vmax.f32 %v204, -100.0
    %v246 = vmax.f32 %v206, -100.0
    %v247 = vmax.f32 %v208, -100.0
    %v248 = vmax.f32 %v210, -100.0
    %v249 = vmax.f32 %v212, -100.0
    %v250 = vmax.f32 %v214, -100.0
    %v251 = vmax.f32 %v216, -100.0
    %v252 = vmax.f32 %v218, -100.0
    %v253 = vmax.f32 %v220, -100.0
    %v254 = vmax.f32 %v222, -100.0
    %v255 = vmax.f32 %v224, -100.0
    %v256 = vmax.f32 %v226, -100.0
    %v257 = vmax.f32 %v228, -100.0
    %v258 = vmax.f32 %v230, -100.0
    %v259 = vmax.f32 %v232, -100.0
    %v260 = vmax.f32 %v234, -100.0
    %v261 = vmax.f32 %v236, -100.0
    %v262 = vmul.f32 %v162, 0.75
    %v263 = vmul.f32 %v163, 0.75
    %v264 = vmul.f32 %v164, 0.75
    %v265 = vmul.f32 %v165, 0.75
    %v266 = vmul.f32 %v166, 0.75
    %v267 = vmul.f32 %v167, 0.75
    %v268 = vmul.f32 %v168, 0.75
    %v269 = vmul.f32 %v169, 0.75
    %v270 = vmul.f32 %v170, 0.75
    %v271 = vmul.f32 %v171, 0.75
    %v272 = vmul.f32 %v172, 0.75
    %v273 = vmul.f32 %v173, 0.75
    %v274 = vmul.f32 %v174, 0.75
    %v275 = vmul.f32 %v175, 0.75
    %v276 = vmul.f32 %v176, 0.75
    %v277 = vmul.f32 %v177, 0.75
    %v278 = vmul.f32 %v178, 0.75
    %v279 = vmul.f32 %v179, 0.75
    %v280 = vmul.f32 %v180, 0.75
    %v281 = vmul.f32 %v181, 0.75
    %v282 = vmul.f32 %v182, 0.75
    %v283 = vmul.f32 %v183, 0.75
    %v284 = vmul.f32 %v184, 0.75
    %v285 = vmul.f32 %v185, 0.75
    %v286 = vmul.f32 %v186, 0.75
    %v287 = vsub.f32 1.0, %v137
    %v288 = vsub.f32 1.0, %v138
    %v289 = vsub.f32 1.0, %v139
    %v290 = vsub.f32 1.0, %v140
    %v291 = vsub.f32 1.0, %v141
    %v292 = vsub.f32 1.0, %v142
    %v293 = vsub.f32 1.0, %v143
    %v294 = vsub.f32 1.0, %v144
    %v295 = vsub.f32 1.0, %v145
    %v296 = vsub.f32 1.0, %v146
    %v297 = vsub.f32 1.0, %v147
    %v298 = vsub.f32 1.0, %v148
    %v299 = vsub.f32 1.0, %v149
    %v300 = vsub.f32 1.0, %v150
    %v301 = vsub.f32 1.0, %v151
    %v302 = vsub.f32 1.0, %v152
    %v303 = vsub.f32 1.0, %v153
    %v304 = vsub.f32 1.0, %v154
    %v305 = vsub.f32 1.0, %v155
    %v306 = vsub.f32 1.0, %v156
    %v307 = vsub.f32 1.0, %v157
    %v308 = vsub.f32 1.0, %v158
    %v309 = vsub.f32 1.0, %v159
    %v310 = vsub.f32 1.0, %v160
    %v311 = vsub.f32 1.0, %v161
    %v312 = vmul.f32 %v262, %v287
    %v313 = vmul.f32 %v263, %v288
    %v314 = vmul.f32 %v264, %v289
    %v315 = vmul.f32 %v265, %v290
    %v316 = vmul.f32 %v266, %v291
    %v317 = vmul.f32 %v267, %v292
    %v318 = vmul.f32 %v268, %v293
    %v319 = vmul.f32 %v269, %v294
    %v320 = vmul.f32 %v270, %v295
    %v321 = vmul.f32 %v271, %v296
    %v322 = vmul.f32 %v272, %v297
    %v323 = vmul.f32 %v273, %v298
    %v324 = vmul.f32 %v274, %v299
    %v325 = vmul.f32 %v275, %v300
    %v326 = vmul.f32 %v276, %v301
    %v327 = vmul.f32 %v277, %v302
    %v328 = vmul.f32 %v278, %v303
    %v329 = vmul.f32 %v279, %v304
    %v330 = vmul.f32 %v280, %v305
    %v331 = vmul.f32 %v281, %v306
    %v332 = vmul.f32 %v282, %v307
    %v333 = vmul.f32 %v283, %v308
    %v334 = vmul.f32 %v284, %v309
    %v335 = vmul.f32 %v285, %v310
    %v336 = vmul.f32 %v286, %v311
    %v337 = vmul.f32 %v112, %v137
    %v338 = vmul.f32 %v113, %v138
    %v339 = vmul.f32 %v114, %v139
    %v340 = vmul.f32 %v115, %v140
    %v341 = vmul.f32 %v116, %v141
    %v342 = vmul.f32 %v117, %v142
    %v343 = vmul.f32 %v118, %v143
    %v344 = vmul.f32 %v119, %v144
    %v345 = vmul.f32 %v120, %v145
    %v346 = vmul.f32 %v121, %v146
    %v347 = vmul.f32 %v122, %v147
    %v348 = vmul.f32 %v123, %v148
    %v349 = vmul.f32 %v124, %v149
    %v350 = vmul.f32 %v125, %v150
    %v351 = vmul.f32 %v126, %v151
    %v352 = vmul.f32 %v127, %v152
    %v353 = vmul.f32 %v128, %v153
    %v354 = vmul.f32 %v129, %v154
    %v355 = vmul.f32 %v130, %v155
    %v356 = vmul.f32 %v131, %v156
    %v357 = vmul.f32 %v132, %v157
    %v358 = vmul.f32 %v133, %v158
    %v359 = vmul.f32 %v134, %v159
    %v360 = vmul.f32 %v135, %v160
    %v361 = vmul.f32 %v136, %v161
    %v362 = vadd.f32 %v312, %v337
    %v363 = vadd.f32 %v313, %v338
    %v364 = vadd.f32 %v314, %v339
    %v365 = vadd.f32 %v315, %v340
    %v366 = vadd.f32 %v316, %v341
    %v367 = vadd.f32 %v317, %v342
    %v368 = vadd.f32 %v318, %v343
    %v369 = vadd.f32 %v319, %v344
    %v370 = vadd.f32 %v320, %v345
    %v371 = vadd.f32 %v321, %v346
    %v372 = vadd.f32 %v322, %v347
    %v373 = vadd.f32 %v323, %v348
    %v374 = vadd.f32 %v324, %v349
    %v375 = vadd.f32 %v325, %v350
    %v376 = vadd.f32 %v326, %v351
    %v377 = vadd.f32 %v327, %v352
    %v378 = vadd.f32 %v328, %v353
    %v379 = vadd.f32 %v329, %v354
    %v380 = vadd.f32 %v330, %v355
    %v381 = vadd.f32 %v331, %v356
    %v382 = vadd.f32 %v332, %v357
    %v383 = vadd.f32 %v333, %v358
    %v384 = vadd.f32 %v334, %v359
    %v385 = vadd.f32 %v335, %v360
    %v386 = vadd.f32 %v336, %v361
    %v387 = vsub.f32 1.0, %v87
    %v388 = vsub.f32 1.0, %v88
    %v389 = vsub.f32 1.0, %v89
    %v390 = vsub.f32 1.0, %v90
    %v391 = vsub.f32 1.0, %v91
    %v392 = vsub.f32 1.0, %v92
    %v393 = vsub.f32 1.0, %v93
    %v394 = vsub.f32 1.0, %v94
    %v395 = vsub.f32 1.0, %v95
    %v396 = vsub.f32 1.0, %v96
    %v397 = vsub.f32 1.0, %v97
    %v398 = vsub.f32 1.0, %v98
    %v399 = vsub.f32 1.0, %v99
    %v400 = vsub.f32 1.0, %v100
    %v401 = vsub.f32 1.0, %v101
    %v402 = vsub.f32 1.0, %v102
    %v403 = vsub.f32 1.0, %v103
    %v404 = vsub.f32 1.0, %v104
    %v405 = vsub.f32 1.0, %v105
    %v406 = vsub.f32 1.0, %v106
    %v407 = vsub.f32 1.0, %v107
    %v408 = vsub.f32 1.0, %v108
    %v409 = vsub.f32 1.0, %v109
    %v410 = vsub.f32 1.0, %v110
    %v411 = vsub.f32 1.0, %v111
    %v412 = vlog2.pop %v387
    %v413 = vmul.f32 %v412, 0.6931472
    %v414 = vlog2.pop %v388
    %v415 = vmul.f32 %v414, 0.6931472
    %v416 = vlog2.pop %v389
    %v417 = vmul.f32 %v416, 0.6931472
    %v418 = vlog2.pop %v390
    %v419 = vmul.f32 %v418, 0.6931472
    %v420 = vlog2.pop %v391
    %v421 = vmul.f32 %v420, 0.6931472
    %v422 = vlog2.pop %v392
    %v423 = vmul.f32 %v422, 0.6931472
    %v424 = vlog2.pop %v393
    %v425 = vmul.f32 %v424, 0.6931472
    %v426 = vlog2.pop %v394
    %v427 = vmul.f32 %v426, 0.6931472
    %v428 = vlog2.pop %v395
    %v429 = vmul.f32 %v428, 0.6931472
    %v430 = vlog2.pop %v396
    %v431 = vmul.f32 %v430, 0.6931472
    %v432 = vlog2.pop %v397
    %v433 = vmul.f32 %v432, 0.6931472
    %v434 = vlog2.pop %v398
    %v435 = vmul.f32 %v434, 0.6931472
    %v436 = vlog2.pop %v399
    %v437 = vmul.f32 %v436, 0.6931472
    %v438 = vlog2.pop %v400
    %v439 = vmul.f32 %v438, 0.6931472
    %v440 = vlog2.pop %v401
    %v441 = vmul.f32 %v440, 0.6931472
    %v442 = vlog2.pop %v402
    %v443 = vmul.f32 %v442, 0.6931472
    %v444 = vlog2.pop %v403
    %v445 = vmul.f32 %v444, 0.6931472
    %v446 = vlog2.pop %v404
    %v447 = vmul.f32 %v446, 0.6931472
    %v448 = vlog2.pop %v405
    %v449 = vmul.f32 %v448, 0.6931472
    %v450 = vlog2.pop %v406
    %v451 = vmul.f32 %v450, 0.6931472
    %v452 = vlog2.pop %v407
    %v453 = vmul.f32 %v452, 0.6931472
    %v454 = vlog2.pop %v408
    %v455 = vmul.f32 %v454, 0.6931472
    %v456 = vlog2.pop %v409
    %v457 = vmul.f32 %v456, 0.6931472
    %v458 = vlog2.pop %v410
    %v459 = vmul.f32 %v458, 0.6931472
    %v460 = vlog2.pop %v411
    %v461 = vmul.f32 %v460, 0.6931472
    %v462 = vmax.f32 %v413, -100.0
    %v463 = vmax.f32 %v415, -100.0
    %v464 = vmax.f32 %v417, -100.0
    %v465 = vmax.f32 %v419, -100.0
    %v466 = vmax.f32 %v421, -100.0
    %v467 = vmax.f32 %v423, -100.0
    %v468 = vmax.f32 %v425, -100.0
    %v469 = vmax.f32 %v427, -100.0
    %v470 = vmax.f32 %v429, -100.0
    %v471 = vmax.f32 %v431, -100.0
    %v472 = vmax.f32 %v433, -100.0
    %v473 = vmax.f32 %v435, -100.0
    %v474 = vmax.f32 %v437, -100.0
    %v475 = vmax.f32 %v439, -100.0
    %v476 = vmax.f32 %v441, -100.0
    %v477 = vmax.f32 %v443, -100.0
    %v478 = vmax.f32 %v445, -100.0
    %v479 = vmax.f32 %v447, -100.0
    %v480 = vmax.f32 %v449, -100.0
    %v481 = vmax.f32 %v451, -100.0
    %v482 = vmax.f32 %v453, -100.0
    %v483 = vmax.f32 %v455, -100.0
    %v484 = vmax.f32 %v457, -100.0
    %v485 = vmax.f32 %v459, -100.0
    %v486 = vmax.f32 %v461, -100.0
    %v487 = vmul.f32 %v112, %v237
    %v488 = vmul.f32 %v113, %v238
    %v489 = vmul.f32 %v114, %v239
    %v490 = vmul.f32 %v115, %v240
    %v491 = vmul.f32 %v116, %v241
    %v492 = vmul.f32 %v117, %v242
    %v493 = vmul.f32 %v118, %v243
    %v494 = vmul.f32 %v119, %v244
    %v495 = vmul.f32 %v120, %v245
    %v496 = vmul.f32 %v121, %v246
    %v497 = vmul.f32 %v122, %v247
    %v498 = vmul.f32 %v123, %v248
    %v499 = vmul.f32 %v124, %v249
    %v500 = vmul.f32 %v125, %v250
    %v501 = vmul.f32 %v126, %v251
    %v502 = vmul.f32 %v127, %v252
    %v503 = vmul.f32 %v128, %v253
    %v504 = vmul.f32 %v129, %v254
    %v505 = vmul.f32 %v130, %v255
    %v506 = vmul.f32 %v131, %v256
    %v507 = vmul.f32 %v132, %v257
    %v508 = vmul.f32 %v133, %v258
    %v509 = vmul.f32 %v134, %v259
    %v510 = vmul.f32 %v135, %v260
    %v511 = vmul.f32 %v136, %v261
    %v512 = vsub.f32 1.0, %v112
    %v513 = vsub.f32 1.0, %v113
    %v514 = vsub.f32 1.0, %v114
    %v515 = vsub.f32 1.0, %v115
    %v516 = vsub.f32 1.0, %v116
    %v517 = vsub.f32 1.0, %v117
    %v518 = vsub.f32 1.0, %v118
    %v519 = vsub.f32 1.0, %v119
    %v520 = vsub.f32 1.0, %v120
    %v521 = vsub.f32 1.0, %v121
    %v522 = vsub.f32 1.0, %v122
    %v523 = vsub.f32 1.0, %v123
    %v524 = vsub.f32 1.0, %v124
    %v525 = vsub.f32 1.0, %v125
    %v526 = vsub.f32 1.0, %v126
    %v527 = vsub.f32 1.0, %v127
    %v528 = vsub.f32 1.0, %v128
    %v529 = vsub.f32 1.0, %v129
    %v530 = vsub.f32 1.0, %v130
    %v531 = vsub.f32 1.0, %v131
    %v532 = vsub.f32 1.0, %v132
    %v533 = vsub.f32 1.0, %v133
    %v534 = vsub.f32 1.0, %v134
    %v535 = vsub.f32 1.0, %v135
    %v536 = vsub.f32 1.0, %v136
    %v537 = vmul.f32 %v512, %v462
    %v538 = vmul.f32 %v513, %v463
    %v539 = vmul.f32 %v514, %v464
    %v540 = vmul.f32 %v515, %v465
    %v541 = vmul.f32 %v516, %v466
    %v542 = vmul.f32 %v517, %v467
    %v543 = vmul.f32 %v518, %v468
    %v544 = vmul.f32 %v519, %v469
    %v545 = vmul.f32 %v520, %v470
    %v546 = vmul.f32 %v521, %v471
    %v547 = vmul.f32 %v522, %v472
    %v548 = vmul.f32 %v523, %v473
    %v549 = vmul.f32 %v524, %v474
    %v550 = vmul.f32 %v525, %v475
    %v551 = vmul.f32 %v526, %v476
    %v552 = vmul.f32 %v527, %v477
    %v553 = vmul.f32 %v528, %v478
    %v554 = vmul.f32 %v529, %v479
    %v555 = vmul.f32 %v530, %v480
    %v556 = vmul.f32 %v531, %v481
    %v557 = vmul.f32 %v532, %v482
    %v558 = vmul.f32 %v533, %v483
    %v559 = vmul.f32 %v534, %v484
    %v560 = vmul.f32 %v535, %v485
    %v561 = vmul.f32 %v536, %v486
    %v562 = vadd.f32 %v487, %v537
    %v563 = vadd.f32 %v488, %v538
    %v564 = vadd.f32 %v489, %v539
    %v565 = vadd.f32 %v490, %v540
    %v566 = vadd.f32 %v491, %v541
    %v567 = vadd.f32 %v492, %v542
    %v568 = vadd.f32 %v493, %v543
    %v569 = vadd.f32 %v494, %v544
    %v570 = vadd.f32 %v495, %v545
    %v571 = vadd.f32 %v496, %v546
    %v572 = vadd.f32 %v497, %v547
    %v573 = vadd.f32 %v498, %v548
    %v574 = vadd.f32 %v499, %v549
    %v575 = vadd.f32 %v500, %v550
    %v576 = vadd.f32 %v501, %v551
    %v577 = vadd.f32 %v502, %v552
    %v578 = vadd.f32 %v503, %v553
    %v579 = vadd.f32 %v504, %v554
    %v580 = vadd.f32 %v505, %v555
    %v581 = vadd.f32 %v506, %v556
    %v582 = vadd.f32 %v507, %v557
    %v583 = vadd.f32 %v508, %v558
    %v584 = vadd.f32 %v509, %v559
    %v585 = vadd.f32 %v510, %v560
    %v586 = vadd.f32 %v511, %v561
    %v587 = vsub.f32 0.0, %v562
    %v588 = vsub.f32 0.0, %v563
    %v589 = vsub.f32 0.0, %v564
    %v590 = vsub.f32 0.0, %v565
    %v591 = vsub.f32 0.0, %v566
    %v592 = vsub.f32 0.0, %v567
    %v593 = vsub.f32 0.0, %v568
    %v594 = vsub.f32 0.0, %v569
    %v595 = vsub.f32 0.0, %v570
    %v596 = vsub.f32 0.0, %v571
    %v597 = vsub.f32 0.0, %v572
    %v598 = vsub.f32 0.0, %v573
    %v599 = vsub.f32 0.0, %v574
    %v600 = vsub.f32 0.0, %v575
    %v601 = vsub.f32 0.0, %v576
    %v602 = vsub.f32 0.0, %v577
    %v603 = vsub.f32 0.0, %v578
    %v604 = vsub.f32 0.0, %v579
    %v605 = vsub.f32 0.0, %v580
    %v606 = vsub.f32 0.0, %v581
    %v607 = vsub.f32 0.0, %v582
    %v608 = vsub.f32 0.0, %v583
    %v609 = vsub.f32 0.0, %v584
    %v610 = vsub.f32 0.0, %v585
    %v611 = vsub.f32 0.0, %v586
    %s612 = sadd.s32 0, 0
    %s613 = smul.u32 %s612, 200
    %v614 = vlaneseq
    %v615 = vshrl.u32 %v614, 7
    %v616 = vadd.s32 %v615, 8
    %v617 = vadd.s32 %v615, 16
    %v618 = vadd.s32 %v615, 24
    %v619 = vadd.s32 %v615, 32
    %v620 = vadd.s32 %v615, 40
    %v621 = vadd.s32 %v615, 48
    %v622 = vadd.s32 %v615, 56
    %v623 = vadd.s32 %v615, 64
    %v624 = vadd.s32 %v615, 72
    %v625 = vadd.s32 %v615, 80
    %v626 = vadd.s32 %v615, 88
    %v627 = vadd.s32 %v615, 96
    %v628 = vadd.s32 %v615, 104
    %v629 = vadd.s32 %v615, 112
    %v630 = vadd.s32 %v615, 120
    %v631 = vadd.s32 %v615, 128
    %v632 = vadd.s32 %v615, 136
    %v633 = vadd.s32 %v615, 144
    %v634 = vadd.s32 %v615, 152
    %v635 = vadd.s32 %v615, 160
    %v636 = vadd.s32 %v615, 168
    %v637 = vadd.s32 %v615, 176
    %v638 = vadd.s32 %v615, 184
    %v639 = vadd.s32 %v615, 192
    %v640 = vstv %s613
    %v641 = vadd.s32 %v640, %v615
    %v642 = vadd.s32 %v640, %v616
    %v643 = vadd.s32 %v640, %v617
    %v644 = vadd.s32 %v640, %v618
    %v645 = vadd.s32 %v640, %v619
    %v646 = vadd.s32 %v640, %v620
    %v647 = vadd.s32 %v640, %v621
    %v648 = vadd.s32 %v640, %v622
    %v649 = vadd.s32 %v640, %v623
    %v650 = vadd.s32 %v640, %v624
    %v651 = vadd.s32 %v640, %v625
    %v652 = vadd.s32 %v640, %v626
    %v653 = vadd.s32 %v640, %v627
    %v654 = vadd.s32 %v640, %v628
    %v655 = vadd.s32 %v640, %v629
    %v656 = vadd.s32 %v640, %v630
    %v657 = vadd.s32 %v640, %v631
    %v658 = vadd.s32 %v640, %v632
    %v659 = vadd.s32 %v640, %v633
    %v660 = vadd.s32 %v640, %v634
    %v661 = vadd.s32 %v640, %v635
    %v662 = vadd.s32 %v640, %v636
    %v663 = vadd.s32 %v640, %v637
    %v664 = vadd.s32 %v640, %v638
    %v665 = vadd.s32 %v640, %v639
    %vm666 = vcmp.lt.s32.totalorder %v641, 200
    %vm667 = vcmp.lt.s32.totalorder %v642, 200
    %vm668 = vcmp.lt.s32.totalorder %v643, 200
    %vm669 = vcmp.lt.s32.totalorder %v644, 200
    %vm670 = vcmp.lt.s32.totalorder %v645, 200
    %vm671 = vcmp.lt.s32.totalorder %v646, 200
    %vm672 = vcmp.lt.s32.totalorder %v647, 200
    %vm673 = vcmp.lt.s32.totalorder %v648, 200
    %vm674 = vcmp.lt.s32.totalorder %v649, 200
    %vm675 = vcmp.lt.s32.totalorder %v650, 200
    %vm676 = vcmp.lt.s32.totalorder %v651, 200
    %vm677 = vcmp.lt.s32.totalorder %v652, 200
    %vm678 = vcmp.lt.s32.totalorder %v653, 200
    %vm679 = vcmp.lt.s32.totalorder %v654, 200
    %vm680 = vcmp.lt.s32.totalorder %v655, 200
    %vm681 = vcmp.lt.s32.totalorder %v656, 200
    %vm682 = vcmp.lt.s32.totalorder %v657, 200
    %vm683 = vcmp.lt.s32.totalorder %v658, 200
    %vm684 = vcmp.lt.s32.totalorder %v659, 200
    %vm685 = vcmp.lt.s32.totalorder %v660, 200
    %vm686 = vcmp.lt.s32.totalorder %v661, 200
    %vm687 = vcmp.lt.s32.totalorder %v662, 200
    %vm688 = vcmp.lt.s32.totalorder %v663, 200
    %vm689 = vcmp.lt.s32.totalorder %v664, 200
    %vm690 = vcmp.lt.s32.totalorder %v665, 200
    %v691 = vmul.f32 %v587, %v362
    %v692 = vmul.f32 %v588, %v363
    %v693 = vmul.f32 %v589, %v364
    %v694 = vmul.f32 %v590, %v365
    %v695 = vmul.f32 %v591, %v366
    %v696 = vmul.f32 %v592, %v367
    %v697 = vmul.f32 %v593, %v368
    %v698 = vmul.f32 %v594, %v369
    %v699 = vmul.f32 %v595, %v370
    %v700 = vmul.f32 %v596, %v371
    %v701 = vmul.f32 %v597, %v372
    %v702 = vmul.f32 %v598, %v373
    %v703 = vmul.f32 %v599, %v374
    %v704 = vmul.f32 %v600, %v375
    %v705 = vmul.f32 %v601, %v376
    %v706 = vmul.f32 %v602, %v377
    %v707 = vmul.f32 %v603, %v378
    %v708 = vmul.f32 %v604, %v379
    %v709 = vmul.f32 %v605, %v380
    %v710 = vmul.f32 %v606, %v381
    %v711 = vmul.f32 %v607, %v382
    %v712 = vmul.f32 %v608, %v383
    %v713 = vmul.f32 %v609, %v384
    %v714 = vmul.f32 %v610, %v385
    %v715 = vmul.f32 %v611, %v386
    %v716 = vsel %vm666, %v691, 0.0
    %v717 = vsel %vm667, %v692, 0.0
    %v718 = vsel %vm668, %v693, 0.0
    %v719 = vsel %vm669, %v694, 0.0
    %v720 = vsel %vm670, %v695, 0.0
    %v721 = vsel %vm671, %v696, 0.0
    %v722 = vsel %vm672, %v697, 0.0
    %v723 = vsel %vm673, %v698, 0.0
    %v724 = vsel %vm674, %v699, 0.0
    %v725 = vsel %vm675, %v700, 0.0
    %v726 = vsel %vm676, %v701, 0.0
    %v727 = vsel %vm677, %v702, 0.0
    %v728 = vsel %vm678, %v703, 0.0
    %v729 = vsel %vm679, %v704, 0.0
    %v730 = vsel %vm680, %v705, 0.0
    %v731 = vsel %vm681, %v706, 0.0
    %v732 = vsel %vm682, %v707, 0.0
    %v733 = vsel %vm683, %v708, 0.0
    %v734 = vsel %vm684, %v709, 0.0
    %v735 = vsel %vm685, %v710, 0.0
    %v736 = vsel %vm686, %v711, 0.0
    %v737 = vsel %vm687, %v712, 0.0
    %v738 = vsel %vm688, %v713, 0.0
    %v739 = vsel %vm689, %v714, 0.0
    %v740 = vsel %vm690, %v715, 0.0
    %v741 = vld [vmem:[#allocation2] sm:$0xff]
    %vm742 = vcmask 654336
    %v743 = vsel %vm742, %v716, 0.0
    %v744 = vsel %vm742, %v717, 0.0
    %v745 = vadd.f32 %v743, %v744
    %v746 = vsel %vm742, %v718, 0.0
    %v747 = vadd.f32 %v745, %v746
    %v748 = vsel %vm742, %v719, 0.0
    %v749 = vadd.f32 %v747, %v748
    %v750 = vsel %vm742, %v720, 0.0
    %v751 = vadd.f32 %v749, %v750
    %v752 = vsel %vm742, %v721, 0.0
    %v753 = vadd.f32 %v751, %v752
    %v754 = vsel %vm742, %v722, 0.0
    %v755 = vadd.f32 %v753, %v754
    %v756 = vsel %vm742, %v723, 0.0
    %v757 = vadd.f32 %v755, %v756
    %v758 = vsel %vm742, %v724, 0.0
    %v759 = vadd.f32 %v757, %v758
    %v760 = vsel %vm742, %v725, 0.0
    %v761 = vadd.f32 %v759, %v760
    %v762 = vsel %vm742, %v726, 0.0
    %v763 = vadd.f32 %v761, %v762
    %v764 = vsel %vm742, %v727, 0.0
    %v765 = vadd.f32 %v763, %v764
    %v766 = vsel %vm742, %v728, 0.0
    %v767 = vadd.f32 %v765, %v766
    %v768 = vsel %vm742, %v729, 0.0
    %v769 = vadd.f32 %v767, %v768
    %v770 = vsel %vm742, %v730, 0.0
    %v771 = vadd.f32 %v769, %v770
    %v772 = vsel %vm742, %v731, 0.0
    %v773 = vadd.f32 %v771, %v772
    %v774 = vsel %vm742, %v732, 0.0
    %v775 = vadd.f32 %v773, %v774
    %v776 = vsel %vm742, %v733, 0.0
    %v777 = vadd.f32 %v775, %v776
    %v778 = vsel %vm742, %v734, 0.0
    %v779 = vadd.f32 %v777, %v778
    %v780 = vsel %vm742, %v735, 0.0
    %v781 = vadd.f32 %v779, %v780
    %v782 = vsel %vm742, %v736, 0.0
    %v783 = vadd.f32 %v781, %v782
    %v784 = vsel %vm742, %v737, 0.0
    %v785 = vadd.f32 %v783, %v784
    %v786 = vsel %vm742, %v738, 0.0
    %v787 = vadd.f32 %v785, %v786
    %v788 = vsel %vm742, %v739, 0.0
    %v789 = vadd.f32 %v787, %v788
    %v790 = vsel %vm742, %v740, 0.0
    %v791 = vadd.f32 %v789, %v790
    %v792 = vadd.f32 %v741, %v791
    %793 = vst.msk [vmem:[#allocation2] sm:$0xff] %vm742, %v792
    // Predicated region
    $region18: #{tpu_custom_call.1} parent=1 // pred_check
      _
    $region19: #{tpu_custom_call.1} parent=1 // pred_check_branch
      %795 = sbr.rel (0) target = $region21
    $region20: #{tpu_custom_call.1} parent=1 // pred_region
      %797 = vsyncadd [#allocation3], 0
      %s799 = sshll.u32 [#allocation2], 4
      %s800 = int_to_ptr.vmem [resolvable:$true] %s799
      %s801 = sshll.u32 %s3, 4
      %s802 = int_to_ptr.hbm [resolvable:$true] %s801
      %804 = dma.vmem_to_hbm [thread:$0]  %s800, 128, %s802, [#allocation3]
    $region21: #{tpu_custom_call.1} parent=1 // pred_fallthru
      _
    // Predicated region
    $region22: #{tpu_custom_call.1} parent=1 // pred_check
      _
    $region23: #{tpu_custom_call.1} parent=1 // pred_check_branch
      %806 = sbr.rel (0) target = $region25
    $region24: #{tpu_custom_call.1} parent=1 // pred_region
      %808 = dma.done [#allocation3], 128
    $region25: #{tpu_custom_call.1} parent=1 // pred_fallthru
      _
    %809 = vsyncpa [#allocation3], 1

</llo_original>
